<compile_context>
chip_gen: v7x
topology: tpu7x:2x2x1
jax: 0.10.0
libtpu: 0.0.40
codegen_flags: <defaults>
</compile_context>

<pallas_src>
import functools

import jax
import jax.numpy as jnp
from jax.experimental import pallas as pl
from jax.experimental.pallas import tpu as pltpu


_LANE = 128                                   # TPU lane width (last-dim granularity)
_VMEM_LIMIT_BYTES = 48 * 1024 * 1024          # raised scoped-VMEM limit (safe on v7x 64 MiB)
_TILE_IO_BUDGET_BYTES = 24 * 1024 * 1024      # budget for double-buffered in+out blocks
_MAX_ROW_TILE = 512                           # diminishing roofline returns beyond this
_SUBLANE_GRAN = {4: 8, 2: 16, 1: 32}          # dtype bytes -> min sublane tile


def _round_up(x: int, m: int) -> int:
    return ((x + m - 1) // m) * m


def _pick_row_tile(rows: int, hidden_p: int, itemsize: int) -> int:
    """Largest dtype-aligned row tile that fits the double-buffered VMEM budget."""
    gran = _SUBLANE_GRAN.get(itemsize, 8)
    io_bytes_per_row = 4 * hidden_p * itemsize          # 2x buffers for input + output blocks
    budget_rows = max(gran, (_TILE_IO_BUDGET_BYTES // io_bytes_per_row) // gran * gran)
    tile = min(budget_rows, _MAX_ROW_TILE, _round_up(rows, gran))
    # Megacore: keep >= 2 grid steps when the problem is big enough so both TCs get work.
    if tile > gran and pl.cdiv(rows, tile) < 2:
        tile = max(gran, _round_up(pl.cdiv(rows, 2), gran))
    return tile


def _rmsn_kernel(x_ref, o_ref, *, mean_dim: int, eps: float):
    # Per-row sum-of-squares reduction + elementwise scale, all in fp32.
    x = x_ref[...].astype(jnp.float32)
    variance = jnp.sum(x * x, axis=-1, keepdims=True) / mean_dim
    o_ref[...] = (x * jax.lax.rsqrt(variance + eps)).astype(o_ref.dtype)


def rmsn_forward(x: jax.Array, mean_dim: int, eps: float = 1e-05,
                 *, row_tile: int | None = None) -> jax.Array:
    """Apply RMSN over the last axis of x (any leading shape)."""
    orig_shape = x.shape
    orig_dtype = x.dtype
    hidden = orig_shape[-1]
    rows = 1
    for d in orig_shape[:-1]:
        rows *= d
    x2d = x.reshape(rows, hidden)

    # Lane-dense layout: pad hidden to a multiple of 128 with zeros. Exact:
    # zeros don't change sum(x**2) and mean_dim is a fixed divisor; padded
    # output columns are dropped below. Skipped when already lane-aligned.
    hidden_p = _round_up(hidden, _LANE)
    if hidden_p != hidden:
        x2d = jnp.pad(x2d, ((0, 0), (0, hidden_p - hidden)))

    itemsize = jnp.dtype(orig_dtype).itemsize
    if row_tile is None:
        row_tile = _pick_row_tile(rows, hidden_p, itemsize)

    grid = (pl.cdiv(rows, row_tile),)  # ragged tail handled by Pallas (masked stores)

    kernel = functools.partial(_rmsn_kernel, mean_dim=mean_dim, eps=eps)

    cost = pl.CostEstimate(
        flops=3 * rows * hidden,
        transcendentals=rows,
        bytes_accessed=2 * rows * hidden * itemsize,
    )

    out2d = pl.pallas_call(
        kernel,
        out_shape=jax.ShapeDtypeStruct((rows, hidden_p), orig_dtype),
        grid_spec=pl.GridSpec(
            grid=grid,
            in_specs=[pl.BlockSpec((row_tile, hidden_p), lambda i: (i, 0))],
            out_specs=pl.BlockSpec((row_tile, hidden_p), lambda i: (i, 0)),
        ),
        compiler_params=pltpu.CompilerParams(
            dimension_semantics=("parallel",),
            vmem_limit_bytes=_VMEM_LIMIT_BYTES,
        ),
        cost_estimate=cost,
    )(x2d)

    if hidden_p != hidden:
        out2d = out2d[:, :hidden]
    return out2d.reshape(orig_shape)


class RMSN:
    """JAX mirror of the PyTorch RMSN module (forward only)."""

    def __init__(self, mean_dim: int, eps: float = 1e-05):
        self.eps = eps
        self.mean_dim = mean_dim
        # Deterministic parameter init (zeros(1)); unused in forward, kept for parity.
        self.weight = jnp.zeros((1,), dtype=jnp.float32)

    def __call__(self, x: jax.Array) -> jax.Array:
        return rmsn_forward(x, self.mean_dim, self.eps)


def _reference(x, mean_dim, eps):
    xf = x.astype(jnp.float32)
    var = jnp.sum(xf * xf, axis=-1, keepdims=True) / mean_dim
    return (xf * jax.lax.rsqrt(var + eps)).astype(x.dtype)


if __name__ == "__main__":
    key = jax.random.PRNGKey(0)
    k1, k2 = jax.random.split(key)

    # Case 1: fp32, small "hidden" (exercises the lane-pad path), rows = 16.
    batch, seq, hidden = 2, 8, 32
    x = jax.random.normal(k1, (batch, seq, hidden), dtype=jnp.float32)
    mod = RMSN(mean_dim=hidden, eps=1e-05)
    out = jax.block_until_ready(mod(x))
    ref = _reference(x, hidden, 1e-05)
    assert out.shape == x.shape and out.dtype == x.dtype
    assert jnp.allclose(out, ref, atol=1e-5, rtol=1e-5), "fp32 mismatch vs reference"

    # Case 2: fp16, awkward row count (exercises the cdiv / masked-tail path
    # and the 16-row sublane granularity for 16-bit dtypes).
    b2, s2, h2 = 3, 5, 96
    x16 = jax.random.normal(k2, (b2, s2, h2), dtype=jnp.float16)
    mod16 = RMSN(mean_dim=h2, eps=1e-05)
    out16 = jax.block_until_ready(mod16(x16))
    ref16 = _reference(x16, h2, 1e-05)
    assert out16.shape == x16.shape and out16.dtype == x16.dtype
    assert jnp.allclose(out16.astype(jnp.float32), ref16.astype(jnp.float32),
                        atol=2e-3, rtol=2e-3), "fp16 mismatch vs reference"

    print("KERNEL_OK")
</pallas_src>

<mosaic_0001>
module attributes {stable_mosaic.version = 11 : i64} {
  func.func @_rmsn_kernel(%arg0: i32, %arg1: memref<8x128xf32, #tpu.memory_space<vmem>>, %arg2: memref<8x128xf32, #tpu.memory_space<vmem>>) attributes {dimension_semantics = [#tpu.dimension_semantics<parallel>], iteration_bounds = array<i64: 2>, scalar_prefetch = 0 : i64, scratch_operands = 0 : i64, tpu.core_type = #tpu.core_type<tc>, window_params = [{transform_indices = @transform_0, window_bounds = array<i64: 8, 128>}, {transform_indices = @transform_1, window_bounds = array<i64: 8, 128>}]} {
    %c0 = arith.constant 0 : index
    %c0_0 = arith.constant 0 : index
    %0 = vector.load %arg1[%c0, %c0_0] : memref<8x128xf32, #tpu.memory_space<vmem>>, vector<8x128xf32>
    %1 = arith.mulf %0, %0 : vector<8x128xf32>
    %cst = arith.constant dense<0.000000e+00> : vector<8xf32>
    %2 = vector.multi_reduction <add>, %1, %cst [1] : vector<8x128xf32> to vector<8xf32>
    %3 = vector.shape_cast %2 : vector<8xf32> to vector<8x1xf32>
    %cst_1 = arith.constant 3.200000e+01 : f32
    %4 = vector.broadcast %cst_1 : f32 to vector<8x1xf32>
    %5 = arith.divf %3, %4 : vector<8x1xf32>
    %cst_2 = arith.constant 9.99999974E-6 : f32
    %6 = vector.broadcast %cst_2 : f32 to vector<8x1xf32>
    %7 = arith.addf %5, %6 : vector<8x1xf32>
    %8 = math.rsqrt %7 : vector<8x1xf32>
    %9 = vector.broadcast %8 : vector<8x1xf32> to vector<8x128xf32>
    %10 = arith.mulf %0, %9 : vector<8x128xf32>
    %c0_3 = arith.constant 0 : index
    %c0_4 = arith.constant 0 : index
    %11 = vector.load %arg2[%c0_3, %c0_4] : memref<8x128xf32, #tpu.memory_space<vmem>>, vector<8x128xf32>
    tpu.vector_store %arg2[%c0_3, %c0_4], %10 {strides = array<i32>} : memref<8x128xf32, #tpu.memory_space<vmem>>, vector<8x128xf32>,
    return
  }
  func.func @transform_0(%arg0: i32) -> (i32, i32) {
    %c0_i32 = arith.constant 0 : i32
    %c0_i32_0 = arith.constant 0 : i32
    return %arg0, %c0_i32 : i32, i32
  }
  func.func @transform_1(%arg0: i32) -> (i32, i32) {
    %c0_i32 = arith.constant 0 : i32
    %c0_i32_0 = arith.constant 0 : i32
    return %arg0, %c0_i32 : i32, i32
  }
}

</mosaic_0001>

<llo_original>
// kernel: tpu_custom_call.1
$region0: #{tpu_custom_call.1}
  #allocation0 [shape = 'u32[]', space=smem, size = 0x4, offset = 0x4, fixed_abs, tag = 'smem constant byte address 0x4 - core index']
  #allocation1 [shape = 'u32[144,128]{1,0:T(1,128)}', space=vmem, size = 0x12000, scoped, tag = 'internal scratch']
  %s0 = inlined_call_operand.hbm [shape: f32[16,128], index: 0, kind: input, shape index: {}]
  %s1 = inlined_call_operand.hbm [shape: f32[16,128], index: 1, kind: output, shape index: {}]
  %s2 = sld [smem:[#allocation0]]
  $region41: #{tpu_custom_call.1} parent=0
    _
  %s4 = ssub.s32 1, %s2
  %s5 = scalar_select 0, %s4, %s2
  $region1: #{tpu_custom_call.1} parent=0
    #allocation2 [shape = 'u8[8192]{0}', space=vmem, size = 0x2000, scoped, tag = 'input window, operand 0']
    #allocation3 [shape = 's32[2]{0}', space=sflag, size = 0x8, scoped, tag = 'scoped memory for tpu_custom_call.1']
    #allocation4 [shape = 's32[2]{0}', space=sflag, size = 0x8, scoped, tag = 'scoped memory for tpu_custom_call.1']
    #allocation5 [shape = 'u8[8192]{0}', space=vmem, size = 0x2000, scoped, tag = 'output window, operand 0']
    %6 = vsyncpa [#allocation3], 0
    %s7 = scalar_lea.sflag [#allocation3], 1
    %8 = vsyncpa %s7, 0
    %9 = vsyncpa [#allocation4], 0
    %s10 = scalar_lea.sflag [#allocation4], 1
    %11 = vsyncpa %s10, 0
    loop: start=0, step=1, limit=4
    $region2: #{tpu_custom_call.1} parent=1 // loop_pre_header
      _
    $region3: #{tpu_custom_call.1} parent=1 // loop_header
      %s13 = sphi 0, %s17
      %p14 = scmp.ge.s32.totalorder %s13, 4
      %s23 = sphi 0, %s25
      %s26 = sphi 0, %s23
      %s27 = sphi 0, %s26
      %s43 = sphi 0, %s27
      %s49 = sphi 0, %s51
      %s52 = sphi 0, %s49
      %s53 = sphi 0, %s52
      %s69 = sphi 0, %s53
    $region4: #{tpu_custom_call.1} parent=1 // loop_header_branch
      %16 = sbr.rel (%p14) target = $region8
    $region5: #{tpu_custom_call.1} parent=1 // loop_body
      %s18 = ssub.s32 %s13, 1
      %s19 = ssub.s32 %s13, 2
      %s20 = sadd.s32 %s13, 1
      %s21 = ssub.s32 %s13, %s20
      %p22 = scmp.eq.s32.totalorder %s21, 0
      %s24 = sadd.s32 %s23, 1
      %s25 = scalar_select %p22, %s23, %s24
      %p28 = pneg %p22
      %p29 = scmp.eq.s32.totalorder %s13, 1
      %p30 = por %p28, %p29
      %p31 = scmp.ne.s32.totalorder %s23, %s26
      %p32 = scmp.eq.s32.totalorder %s13, 0
      %p33 = por %p31, %p32
      %p34 = scmp.ne.s32.totalorder %s23, %s26
      %p35 = scmp.eq.s32.totalorder %s18, 1
      %p36 = por %p34, %p35
      %p37 = scmp.ne.s32.totalorder %s26, %s27
      %p38 = scmp.eq.s32.totalorder %s18, 0
      %p39 = por %p37, %p38
      %p40 = scmp.ne.s32.totalorder %s26, %s27
      %p41 = scmp.eq.s32.totalorder %s19, 1
      %p42 = por %p40, %p41
      %p44 = scmp.ne.s32.totalorder %s27, %s43
      %p45 = scmp.eq.s32.totalorder %s19, 0
      %p46 = por %p44, %p45
      %s47 = ssub.s32 %s13, %s20
      %p48 = scmp.eq.s32.totalorder %s47, 0
      %s50 = sadd.s32 %s49, 1
      %s51 = scalar_select %p48, %s49, %s50
      %p54 = pneg %p48
      %p55 = scmp.eq.s32.totalorder %s13, 1
      %p56 = por %p54, %p55
      %p57 = scmp.ne.s32.totalorder %s49, %s52
      %p58 = scmp.eq.s32.totalorder %s13, 0
      %p59 = por %p57, %p58
      %p60 = scmp.ne.s32.totalorder %s49, %s52
      %p61 = scmp.eq.s32.totalorder %s18, 1
      %p62 = por %p60, %p61
      %p63 = scmp.ne.s32.totalorder %s52, %s53
      %p64 = scmp.eq.s32.totalorder %s18, 0
      %p65 = por %p63, %p64
      %p66 = scmp.ne.s32.totalorder %s52, %s53
      %p67 = scmp.eq.s32.totalorder %s19, 1
      %p68 = por %p66, %p67
      %p70 = scmp.ne.s32.totalorder %s53, %s69
      %p71 = scmp.eq.s32.totalorder %s19, 0
      %p72 = por %p70, %p71
      %p73 = scmp.le.s32.totalorder 1, %s13
      %p74 = scmp.lt.s32.totalorder %s13, 3
      %p75 = pnand %p73, %p74
      %p76 = pneg %p75
      // Predicated region
      $region9: #{tpu_custom_call.1} parent=5 // pred_check
        _
      $region10: #{tpu_custom_call.1} parent=5 // pred_check_branch
        %78 = sbr.rel (%p75) target = $region12
      $region11: #{tpu_custom_call.1} parent=5 // pred_region
        %s79 = ssub.s32 %s13, 1
      $region12: #{tpu_custom_call.1} parent=5 // pred_fallthru
        _
      %p80 = scmp.lt.s32.totalorder %s13, 2
      // Predicated region
      $region13: #{tpu_custom_call.1} parent=5 // pred_check
        %p81 = pneg %p80
      $region14: #{tpu_custom_call.1} parent=5 // pred_check_branch
        %83 = sbr.rel (%p81) target = $region16
      $region15: #{tpu_custom_call.1} parent=5 // pred_region
        // Predicated region
        $region17: #{tpu_custom_call.1} parent=15 // pred_check
          %p84 = pneg %p33
        $region18: #{tpu_custom_call.1} parent=15 // pred_check_branch
          %86 = sbr.rel (%p84) target = $region20
        $region19: #{tpu_custom_call.1} parent=15 // pred_region
          %s87 = sand.u32 %s23, 1
          %s88 = scalar_lea.sflag [#allocation3], %s87
          %s89 = sand.u32 %s23, 1
          %s90 = smul.addr %s89, 8
          %s91 = scalar_lea.vmem [#allocation2], %s90
          %s93 = ssub.s32 128, 128
          %94 = vsyncadd %s88, %s93
          %s95 = smul.addr %s13, 128
          %s96 = scalar_lea.hbm %s0, %s95
          %s98 = sshll.u32 %s91, 4
          %s99 = int_to_ptr.vmem [resolvable:$true] %s98
          %101 = dma.hbm_to_vmem [thread:$0]  %s96, 128, %s99, %s88
        $region20: #{tpu_custom_call.1} parent=15 // pred_fallthru
          _
      $region16: #{tpu_custom_call.1} parent=5 // pred_fallthru
        _
      %p102 = scmp.le.s32.totalorder 1, %s13
      %p103 = scmp.lt.s32.totalorder %s13, 3
      %p104 = pnand %p102, %p103
      %p105 = pneg %p104
      // Predicated region
      $region21: #{tpu_custom_call.1} parent=5 // pred_check
        _
      $region22: #{tpu_custom_call.1} parent=5 // pred_check_branch
        %107 = sbr.rel (%p104) target = $region24
      $region23: #{tpu_custom_call.1} parent=5 // pred_region
        %s108 = ssub.s32 %s13, 1
        %s109 = sand.u32 %s26, 1
        %s110 = scalar_lea.sflag [#allocation3], %s109
        %s111 = sand.u32 %s26, 1
        %s112 = smul.addr %s111, 8
        %s113 = scalar_lea.vmem [#allocation2], %s112
        // Predicated region
        $region25: #{tpu_custom_call.1} parent=23 // pred_check
          %p114 = pneg %p39
        $region26: #{tpu_custom_call.1} parent=23 // pred_check_branch
          %116 = sbr.rel (%p114) target = $region28
        $region27: #{tpu_custom_call.1} parent=23 // pred_region
          %117 = dma.done %s110, 128
        $region28: #{tpu_custom_call.1} parent=23 // pred_fallthru
          _
        %s118 = sand.u32 %s26, 1
        %s119 = scalar_lea.sflag [#allocation3], %s118
        %s120 = sand.u32 %s26, 1
        %s121 = smul.addr %s120, 8
        %s122 = scalar_lea.vmem [#allocation2], %s121
        %p123 = pneg %p39
        %p124 = pneg %p36
        %p125 = pneg %p65
        %p126 = pneg %p62
        %s127 = sand.u32 %s52, 1
        %s128 = scalar_lea.sflag [#allocation4], %s127
        %s129 = sand.u32 %s52, 1
        %s130 = smul.addr %s129, 8
        %s131 = scalar_lea.vmem [#allocation5], %s130
        %v132 = vld [vmem:[%s113] sm:$0xff]
        %v133 = vmul.f32 %v132, %v132
        %134 = vadd.xlane.f32.xlu0 %v133
        %v135 = vpop.xlane.xlu0 %134
        %v136 = vrcp.pop 32.0
        %v137 = vmul.f32 %v135, %v136
        %v138 = vadd.f32 %v137, 1e-05
        %v139 = vrsqrt.pop %v138
        %v140 = vmul.f32 %v132, %v139
        %141 = vst [vmem:[%s131] sm:$0xff] %v140
        %s142 = sand.u32 %s52, 1
        %s143 = scalar_lea.sflag [#allocation4], %s142
        %s144 = sand.u32 %s52, 1
        %s145 = smul.addr %s144, 8
        %s146 = scalar_lea.vmem [#allocation5], %s145
        // Predicated region
        $region29: #{tpu_custom_call.1} parent=23 // pred_check
          %p147 = pneg %p62
        $region30: #{tpu_custom_call.1} parent=23 // pred_check_branch
          %149 = sbr.rel (%p147) target = $region32
        $region31: #{tpu_custom_call.1} parent=23 // pred_region
          %s151 = ssub.s32 128, 128
          %152 = vsyncadd %s143, %s151
          %s153 = smul.addr %s18, 128
          %s154 = scalar_lea.hbm %s1, %s153
          %s156 = sshll.u32 %s146, 4
          %s157 = int_to_ptr.vmem [resolvable:$true] %s156
          %159 = dma.vmem_to_hbm [thread:$0]  %s157, 128, %s154, %s143
        $region32: #{tpu_custom_call.1} parent=23 // pred_fallthru
          _
      $region24: #{tpu_custom_call.1} parent=5 // pred_fallthru
        _
      %p160 = scmp.le.s32.totalorder 2, %s13
      // Predicated region
      $region33: #{tpu_custom_call.1} parent=5 // pred_check
        %p161 = pneg %p160
      $region34: #{tpu_custom_call.1} parent=5 // pred_check_branch
        %163 = sbr.rel (%p161) target = $region36
      $region35: #{tpu_custom_call.1} parent=5 // pred_region
        %s164 = ssub.s32 %s13, 2
        // Predicated region
        $region37: #{tpu_custom_call.1} parent=35 // pred_check
          %p165 = pneg %p68
        $region38: #{tpu_custom_call.1} parent=35 // pred_check_branch
          %167 = sbr.rel (%p165) target = $region40
        $region39: #{tpu_custom_call.1} parent=35 // pred_region
          %s168 = sand.u32 %s53, 1
          %s169 = scalar_lea.sflag [#allocation4], %s168
          %s170 = sand.u32 %s53, 1
          %s171 = smul.addr %s170, 8
          %s172 = scalar_lea.vmem [#allocation5], %s171
          %173 = dma.done %s169, 128
        $region40: #{tpu_custom_call.1} parent=35 // pred_fallthru
          _
      $region36: #{tpu_custom_call.1} parent=5 // pred_fallthru
        _
    $region6: #{tpu_custom_call.1} parent=1 // loop_footer
      %s17 = sadd.s32 1, %s13
    $region7: #{tpu_custom_call.1} parent=1 // loop_footer_branch
      %12 = sbr.rel target = $region3
    $region8: #{tpu_custom_call.1} parent=1 // loop_exit
      _
    %174 = vsyncpa [#allocation3], 1
    %s175 = scalar_lea.sflag [#allocation3], 1
    %176 = vsyncpa %s175, 1
    %177 = vsyncpa [#allocation4], 1
    %s178 = scalar_lea.sflag [#allocation4], 1
    %179 = vsyncpa %s178, 1

</llo_original>
